<compile_context>
chip_gen: v6e
topology: v6e:2x2x1
jax: 0.10.0
libtpu: 0.0.40
codegen_flags: <defaults>
</compile_context>

<pallas_src>
import jax
import jax.numpy as jnp
from jax.experimental import pallas as pl
from jax.experimental.pallas import tpu as pltpu


def pooler_kernel(x_ref, w_ref, b_ref, o_ref):
    # x_ref: [B, H]    first-token activations (constant block -> VMEM resident)
    # w_ref: [TN, H]   torch-layout [out, in] weight tile (streamed, native dtype)
    # b_ref: [1, TN]   bias tile (f32)
    # o_ref: [B, TN]   output tile
    x = x_ref[...].astype(w_ref.dtype)  # no-op when dtypes already match
    # y[b, n] = sum_k x[b, k] * w[n, k]  ==  x @ W.T without materializing W.T.
    # (Equivalent to pl.dot(x, w, trans_b=True); MXU consumes the transposed
    #  rhs operand natively, no per-tile XLU transpose.)
    y = jax.lax.dot_general(
        x, w_ref[...],
        dimension_numbers=(((1,), (1,)), ((), ())),
        preferred_element_type=jnp.float32,
    )
    o_ref[...] = jnp.tanh(y + b_ref[...]).astype(o_ref.dtype)


def _pick_block_n(H: int, itemsize: int,
                  pair_budget_bytes: int = 8 * 1024 * 1024) -> int:
    """Output-dim tile size.

    Picks the largest 128-multiple divisor of H that (a) is strictly smaller
    than H (so the grid has >= 2 tiles and v7x's two TensorCores both get
    work) and (b) keeps the double-buffered weight tile pair within the VMEM
    budget, using the weight's actual bytes-per-element.  Falls back to the
    smallest 128-multiple divisor, then to a full-extent block when H has no
    128-multiple divisor (the block-shape rules require either).
    """
    cands = [d for d in range(128, H, 128) if H % d == 0]
    fitting = [d for d in cands if 2 * d * H * itemsize <= pair_budget_bytes]
    if fitting:
        return max(fitting)
    if cands:
        return min(cands)
    return H  # no 128-multiple divisor: full-extent block sidesteps tiling rules


def bert_pooler(hidden_states, weight, bias, *, block_n=None):
    """hidden_states: [B, S, H]; weight: [H, H] torch [out, in]; bias: [H].
    Returns tanh(hidden_states[:, 0] @ weight.T + bias), shape [B, H]."""
    B, S, H = hidden_states.shape
    out_dtype = hidden_states.dtype

    # Fuse the first-token slice into the pallas DMA when the lane constraint
    # allows it (a (B, H) block of the (B, S*H) view needs H % 128 == 0);
    # otherwise fall back to a tiny wrapper-side slice of B*H elements.
    if S == 1 or H % 128 == 0:
        x_in = hidden_states.reshape(B, S * H)   # free (contiguous) reshape
    else:
        x_in = hidden_states[:, 0, :]

    # Stream the weight in its native dtype (no wrapper-side cast -> no extra
    # HBM pass); keep the bias in f32 for the epilogue.
    w = weight
    b2d = bias.astype(jnp.float32).reshape(1, H)

    w_itemsize = jnp.dtype(w.dtype).itemsize
    if block_n is None:
        block_n = _pick_block_n(H, w_itemsize)
    assert H % block_n == 0 and (block_n % 128 == 0 or block_n == H)
    grid = (H // block_n,)

    x_itemsize = jnp.dtype(x_in.dtype).itemsize
    out_itemsize = jnp.dtype(out_dtype).itemsize
    cost = pl.CostEstimate(
        flops=2 * B * H * H,
        transcendentals=B * H,
        bytes_accessed=(H * H * w_itemsize          # weight stream
                        + B * H * x_itemsize        # first-token activations
                        + B * H * out_itemsize      # pooled output
                        + H * 4),                   # bias
    )

    return pl.pallas_call(
        pooler_kernel,
        out_shape=jax.ShapeDtypeStruct((B, H), out_dtype),
        grid=grid,
        in_specs=[
            # First-token activations: same block every step -> no re-DMA.
            pl.BlockSpec((B, H), lambda j: (0, 0)),
            # Weight tile over the out-features dim (torch [out, in] layout).
            pl.BlockSpec((block_n, H), lambda j: (j, 0)),
            # Matching bias tile.
            pl.BlockSpec((1, block_n), lambda j: (0, j)),
        ],
        out_specs=pl.BlockSpec((B, block_n), lambda j: (0, j)),
        compiler_params=pltpu.CompilerParams(
            dimension_semantics=("parallel",),   # independent N tiles -> v7x megacore
        ),
        cost_estimate=cost,
    )(x_in, w, b2d)


if __name__ == "__main__":
    # Small but lane-aligned shapes: batch=2, seq=8, hidden=256.
    B, S, H = 2, 8, 256

    key = jax.random.PRNGKey(0)
    k_x, k_w, k_b = jax.random.split(key, 3)

    hidden_states = jax.random.normal(k_x, (B, S, H), dtype=jnp.float32)
    # torch nn.Linear stores weight as [out, in].
    weight = jax.random.normal(k_w, (H, H), dtype=jnp.float32) * 0.02
    bias = jax.random.normal(k_b, (H,), dtype=jnp.float32) * 0.02

    out = jax.block_until_ready(bert_pooler(hidden_states, weight, bias))

    # Plain-JAX f32 reference. The weight is now streamed in its native f32,
    # so the tolerance can be tight (only MXU pass-splitting differences).
    ref = jnp.tanh(hidden_states[:, 0, :] @ weight.T + bias)
    assert out.shape == (B, H)
    assert out.dtype == hidden_states.dtype
    assert jnp.allclose(out, ref, atol=2e-3, rtol=2e-3), (
        float(jnp.max(jnp.abs(out - ref))))

    print("KERNEL_OK")
</pallas_src>

<mosaic_0001>
module attributes {stable_mosaic.version = 11 : i64} {
  func.func @pooler_kernel(%arg0: i32, %arg1: memref<2x256xf32, #tpu.memory_space<vmem>>, %arg2: memref<128x256xf32, #tpu.memory_space<vmem>>, %arg3: memref<1x128xf32, #tpu.memory_space<vmem>>, %arg4: memref<2x128xf32, #tpu.memory_space<vmem>>) attributes {dimension_semantics = [#tpu.dimension_semantics<parallel>], iteration_bounds = array<i64: 2>, scalar_prefetch = 0 : i64, scratch_operands = 0 : i64, tpu.core_type = #tpu.core_type<tc>, window_params = [{transform_indices = @transform_0, window_bounds = array<i64: 2, 256>}, {transform_indices = @transform_1, window_bounds = array<i64: 128, 256>}, {transform_indices = @transform_2, window_bounds = array<i64: 1, 128>}, {transform_indices = @transform_3, window_bounds = array<i64: 2, 128>}]} {
    %c0 = arith.constant 0 : index
    %c0_0 = arith.constant 0 : index
    %0 = vector.load %arg1[%c0, %c0_0] : memref<2x256xf32, #tpu.memory_space<vmem>>, vector<2x256xf32>
    %c0_1 = arith.constant 0 : index
    %c0_2 = arith.constant 0 : index
    %1 = vector.load %arg2[%c0_1, %c0_2] : memref<128x256xf32, #tpu.memory_space<vmem>>, vector<128x256xf32>
    %cst = arith.constant dense<0.000000e+00> : vector<2x128xf32>
    %2 = tpu.matmul %0, %1, %cst {dimension_numbers = #tpu.dot_dimension_numbers<[1], [1], [0], [0], [0, 0, 1, 0], [], []>} : vector<2x256xf32>, vector<128x256xf32>, vector<2x128xf32> -> vector<2x128xf32>
    %c0_3 = arith.constant 0 : index
    %c0_4 = arith.constant 0 : index
    %3 = vector.load %arg3[%c0_3, %c0_4] : memref<1x128xf32, #tpu.memory_space<vmem>>, vector<1x128xf32>
    %4 = vector.broadcast %3 : vector<1x128xf32> to vector<2x128xf32>
    %5 = arith.addf %2, %4 : vector<2x128xf32>
    %6 = math.tanh %5 : vector<2x128xf32>
    %c0_5 = arith.constant 0 : index
    %c0_6 = arith.constant 0 : index
    %7 = vector.load %arg4[%c0_5, %c0_6] : memref<2x128xf32, #tpu.memory_space<vmem>>, vector<2x128xf32>
    tpu.vector_store %arg4[%c0_5, %c0_6], %6 {strides = array<i32>} : memref<2x128xf32, #tpu.memory_space<vmem>>, vector<2x128xf32>,
    return
  }
  func.func @transform_0(%arg0: i32) -> (i32, i32) {
    %c0_i32 = arith.constant 0 : i32
    %c0_i32_0 = arith.constant 0 : i32
    %c0_i32_1 = arith.constant 0 : i32
    return %c0_i32, %c0_i32_0 : i32, i32
  }
  func.func @transform_1(%arg0: i32) -> (i32, i32) {
    %c0_i32 = arith.constant 0 : i32
    %c0_i32_0 = arith.constant 0 : i32
    return %arg0, %c0_i32 : i32, i32
  }
  func.func @transform_2(%arg0: i32) -> (i32, i32) {
    %c0_i32 = arith.constant 0 : i32
    %c0_i32_0 = arith.constant 0 : i32
    return %c0_i32, %arg0 : i32, i32
  }
  func.func @transform_3(%arg0: i32) -> (i32, i32) {
    %c0_i32 = arith.constant 0 : i32
    %c0_i32_0 = arith.constant 0 : i32
    return %c0_i32, %arg0 : i32, i32
  }
}

</mosaic_0001>

<llo_original>
// kernel: tpu_custom_call.1
$region0: #{tpu_custom_call.1}
  #allocation0 [shape = 'u32[]', space=smem, size = 0x4, offset = 0x4, fixed_abs, tag = 'smem constant byte address 0x4 - core index']
  #allocation1 [shape = 'u32[144,128]{1,0:T(1,128)}', space=vmem, size = 0x12000, scoped, tag = 'internal scratch']
  %s0 = inlined_call_operand.hbm [shape: f32[2,2048], index: 0, kind: input, shape index: {}]
  %s1 = inlined_call_operand.hbm [shape: f32[256,256], index: 1, kind: input, shape index: {}]
  %s2 = inlined_call_operand.vmem [shape: f32[1,256], index: 2, kind: input, shape index: {}]
  %s3 = inlined_call_operand.hbm [shape: f32[2,256], index: 3, kind: output, shape index: {}]
  %s4 = sld [smem:[#allocation0]]
  $region53: #{tpu_custom_call.1} parent=0
    _
  %s6 = ssub.s32 1, %s4
  %s7 = scalar_select 0, %s6, %s4
  $region1: #{tpu_custom_call.1} parent=0
    #allocation2 [shape = 'u8[2048]{0}', space=vmem, size = 0x800, scoped, tag = 'input window, operand 0, single buffered']
    #allocation3 [shape = 's32[2]{0}', space=sflag, size = 0x8, scoped, tag = 'scoped memory for tpu_custom_call.1']
    #allocation4 [shape = 's32[2]{0}', space=sflag, size = 0x8, scoped, tag = 'scoped memory for tpu_custom_call.1']
    #allocation5 [shape = 'u8[262144]{0}', space=vmem, size = 0x40000, scoped, tag = 'input window, operand 1']
    #allocation6 [shape = 's32[2]{0}', space=sflag, size = 0x8, scoped, tag = 'scoped memory for tpu_custom_call.1']
    #allocation7 [shape = 'u8[2048]{0}', space=vmem, size = 0x800, scoped, tag = 'output window, operand 0']
    %8 = vsyncpa [#allocation3], 0
    %9 = vsyncpa [#allocation6], 0
    %s10 = scalar_lea.sflag [#allocation6], 1
    %11 = vsyncpa %s10, 0
    %12 = vsyncpa [#allocation4], 0
    %s13 = scalar_lea.sflag [#allocation4], 1
    %14 = vsyncpa %s13, 0
    loop: start=0, step=1, limit=4
    $region2: #{tpu_custom_call.1} parent=1 // loop_pre_header
      _
    $region3: #{tpu_custom_call.1} parent=1 // loop_header
      %s16 = sphi 0, %s20
      %p17 = scmp.ge.s32.totalorder %s16, 4
      %s24 = sphi 0, %s24
      %s26 = sphi 0, %s24
      %s27 = sphi 0, %s26
      %s41 = sphi 0, %s27
      %s47 = sphi 0, %s49
      %s50 = sphi 0, %s47
      %s51 = sphi 0, %s50
      %s67 = sphi 0, %s51
      %s73 = sphi 0, %s75
      %s76 = sphi 0, %s73
      %s77 = sphi 0, %s76
      %s93 = sphi 0, %s77
      %s99 = sphi 0, %s101
      %s102 = sphi 0, %s99
      %s103 = sphi 0, %s102
      %s119 = sphi 0, %s103
    $region4: #{tpu_custom_call.1} parent=1 // loop_header_branch
      %19 = sbr.rel (%p17) target = $region8
    $region5: #{tpu_custom_call.1} parent=1 // loop_body
      %s21 = ssub.s32 %s16, 1
      %s22 = ssub.s32 %s16, 2
      %s23 = sadd.s32 %s16, 1
      %s25 = sadd.s32 %s24, 1
      %p28 = scmp.eq.s32.totalorder %s16, 1
      %p29 = scmp.ne.s32.totalorder %s24, %s26
      %p30 = scmp.eq.s32.totalorder %s16, 0
      %p31 = por %p29, %p30
      %p32 = scmp.ne.s32.totalorder %s24, %s26
      %p33 = scmp.eq.s32.totalorder %s21, 1
      %p34 = por %p32, %p33
      %p35 = scmp.ne.s32.totalorder %s26, %s27
      %p36 = scmp.eq.s32.totalorder %s21, 0
      %p37 = por %p35, %p36
      %p38 = scmp.ne.s32.totalorder %s26, %s27
      %p39 = scmp.eq.s32.totalorder %s22, 1
      %p40 = por %p38, %p39
      %p42 = scmp.ne.s32.totalorder %s27, %s41
      %p43 = scmp.eq.s32.totalorder %s22, 0
      %p44 = por %p42, %p43
      %s45 = ssub.s32 %s16, %s23
      %p46 = scmp.eq.s32.totalorder %s45, 0
      %s48 = sadd.s32 %s47, 1
      %s49 = scalar_select %p46, %s47, %s48
      %p52 = pneg %p46
      %p53 = scmp.eq.s32.totalorder %s16, 1
      %p54 = por %p52, %p53
      %p55 = scmp.ne.s32.totalorder %s47, %s50
      %p56 = scmp.eq.s32.totalorder %s16, 0
      %p57 = por %p55, %p56
      %p58 = scmp.ne.s32.totalorder %s47, %s50
      %p59 = scmp.eq.s32.totalorder %s21, 1
      %p60 = por %p58, %p59
      %p61 = scmp.ne.s32.totalorder %s50, %s51
      %p62 = scmp.eq.s32.totalorder %s21, 0
      %p63 = por %p61, %p62
      %p64 = scmp.ne.s32.totalorder %s50, %s51
      %p65 = scmp.eq.s32.totalorder %s22, 1
      %p66 = por %p64, %p65
      %p68 = scmp.ne.s32.totalorder %s51, %s67
      %p69 = scmp.eq.s32.totalorder %s22, 0
      %p70 = por %p68, %p69
      %s71 = ssub.s32 %s16, %s23
      %p72 = scmp.eq.s32.totalorder %s71, 0
      %s74 = sadd.s32 %s73, 1
      %s75 = scalar_select %p72, %s73, %s74
      %p78 = pneg %p72
      %p79 = scmp.eq.s32.totalorder %s16, 1
      %p80 = por %p78, %p79
      %p81 = scmp.ne.s32.totalorder %s73, %s76
      %p82 = scmp.eq.s32.totalorder %s16, 0
      %p83 = por %p81, %p82
      %p84 = scmp.ne.s32.totalorder %s73, %s76
      %p85 = scmp.eq.s32.totalorder %s21, 1
      %p86 = por %p84, %p85
      %p87 = scmp.ne.s32.totalorder %s76, %s77
      %p88 = scmp.eq.s32.totalorder %s21, 0
      %p89 = por %p87, %p88
      %p90 = scmp.ne.s32.totalorder %s76, %s77
      %p91 = scmp.eq.s32.totalorder %s22, 1
      %p92 = por %p90, %p91
      %p94 = scmp.ne.s32.totalorder %s77, %s93
      %p95 = scmp.eq.s32.totalorder %s22, 0
      %p96 = por %p94, %p95
      %s97 = ssub.s32 %s16, %s23
      %p98 = scmp.eq.s32.totalorder %s97, 0
      %s100 = sadd.s32 %s99, 1
      %s101 = scalar_select %p98, %s99, %s100
      %p104 = pneg %p98
      %p105 = scmp.eq.s32.totalorder %s16, 1
      %p106 = por %p104, %p105
      %p107 = scmp.ne.s32.totalorder %s99, %s102
      %p108 = scmp.eq.s32.totalorder %s16, 0
      %p109 = por %p107, %p108
      %p110 = scmp.ne.s32.totalorder %s99, %s102
      %p111 = scmp.eq.s32.totalorder %s21, 1
      %p112 = por %p110, %p111
      %p113 = scmp.ne.s32.totalorder %s102, %s103
      %p114 = scmp.eq.s32.totalorder %s21, 0
      %p115 = por %p113, %p114
      %p116 = scmp.ne.s32.totalorder %s102, %s103
      %p117 = scmp.eq.s32.totalorder %s22, 1
      %p118 = por %p116, %p117
      %p120 = scmp.ne.s32.totalorder %s103, %s119
      %p121 = scmp.eq.s32.totalorder %s22, 0
      %p122 = por %p120, %p121
      %p123 = scmp.le.s32.totalorder 1, %s16
      %p124 = scmp.lt.s32.totalorder %s16, 3
      %p125 = pnand %p123, %p124
      %p126 = pneg %p125
      // Predicated region
      $region9: #{tpu_custom_call.1} parent=5 // pred_check
        _
      $region10: #{tpu_custom_call.1} parent=5 // pred_check_branch
        %128 = sbr.rel (%p125) target = $region12
      $region11: #{tpu_custom_call.1} parent=5 // pred_region
        %s129 = ssub.s32 %s16, 1
        // Predicated region
        $region13: #{tpu_custom_call.1} parent=11 // pred_check
          %p130 = pneg %p37
        $region14: #{tpu_custom_call.1} parent=11 // pred_check_branch
          %132 = sbr.rel (%p130) target = $region16
        $region15: #{tpu_custom_call.1} parent=11 // pred_region
          %s134 = ssub.s32 64, 64
          %135 = vsyncadd [#allocation3], %s134
          %s137 = sshll.u32 [#allocation2], 4
          %s138 = int_to_ptr.vmem [resolvable:$true] %s137
          %140 = dma.hbm_to_vmem [thread:$0]  %s0, 64, %s138, [#allocation3]
        $region16: #{tpu_custom_call.1} parent=11 // pred_fallthru
          _
      $region12: #{tpu_custom_call.1} parent=5 // pred_fallthru
        _
      %p141 = scmp.lt.s32.totalorder %s16, 2
      // Predicated region
      $region17: #{tpu_custom_call.1} parent=5 // pred_check
        %p142 = pneg %p141
      $region18: #{tpu_custom_call.1} parent=5 // pred_check_branch
        %144 = sbr.rel (%p142) target = $region20
      $region19: #{tpu_custom_call.1} parent=5 // pred_region
        // Predicated region
        $region21: #{tpu_custom_call.1} parent=19 // pred_check
          %p145 = pneg %p57
        $region22: #{tpu_custom_call.1} parent=19 // pred_check_branch
          %147 = sbr.rel (%p145) target = $region24
        $region23: #{tpu_custom_call.1} parent=19 // pred_region
          %s148 = sand.u32 %s47, 1
          %s149 = scalar_lea.sflag [#allocation6], %s148
          %s150 = sand.u32 %s47, 1
          %s151 = smul.addr %s150, 256
          %s152 = scalar_lea.vmem [#allocation5], %s151
          %s153 = smul.u32 16, %s16
          %s155 = ssub.s32 4096, 4096
          %156 = vsyncadd %s149, %s155
          %s157 = smul.addr %s153, 2
          %s158 = smul.addr %s157, 128
          %s159 = scalar_lea.hbm %s1, %s158
          %s160 = sshll.u32 %s152, 4
          %s161 = int_to_ptr.vmem [resolvable:$true] %s160
          %166 = dma.hbm_to_vmem [thread:$0]  %s159, 4096, %s161, %s149, 256, 256, 16
        $region24: #{tpu_custom_call.1} parent=19 // pred_fallthru
          _
        // Predicated region
        $region25: #{tpu_custom_call.1} parent=19 // pred_check
          %p167 = pneg %p83
        $region26: #{tpu_custom_call.1} parent=19 // pred_check_branch
          %169 = sbr.rel (%p167) target = $region28
        $region27: #{tpu_custom_call.1} parent=19 // pred_region
          %p170 = scmp.lt.s32.totalorder %s16, 1
          %s171 = scalar_select %p170, %s16, 1
          %s172 = scalar_lea.vmem %s2, %s171
        $region28: #{tpu_custom_call.1} parent=19 // pred_fallthru
          _
      $region20: #{tpu_custom_call.1} parent=5 // pred_fallthru
        _
      %p173 = scmp.le.s32.totalorder 1, %s16
      %p174 = scmp.lt.s32.totalorder %s16, 3
      %p175 = pnand %p173, %p174
      %p176 = pneg %p175
      // Predicated region
      $region29: #{tpu_custom_call.1} parent=5 // pred_check
        _
      $region30: #{tpu_custom_call.1} parent=5 // pred_check_branch
        %178 = sbr.rel (%p175) target = $region32
      $region31: #{tpu_custom_call.1} parent=5 // pred_region
        %s179 = ssub.s32 %s16, 1
        // Predicated region
        $region33: #{tpu_custom_call.1} parent=31 // pred_check
          %p180 = pneg %p37
        $region34: #{tpu_custom_call.1} parent=31 // pred_check_branch
          %182 = sbr.rel (%p180) target = $region36
        $region35: #{tpu_custom_call.1} parent=31 // pred_region
          %183 = dma.done [#allocation3], 64
        $region36: #{tpu_custom_call.1} parent=31 // pred_fallthru
          _
        %s184 = sand.u32 %s50, 1
        %s185 = scalar_lea.sflag [#allocation6], %s184
        %s186 = sand.u32 %s50, 1
        %s187 = smul.addr %s186, 256
        %s188 = scalar_lea.vmem [#allocation5], %s187
        // Predicated region
        $region37: #{tpu_custom_call.1} parent=31 // pred_check
          %p189 = pneg %p63
        $region38: #{tpu_custom_call.1} parent=31 // pred_check_branch
          %191 = sbr.rel (%p189) target = $region40
        $region39: #{tpu_custom_call.1} parent=31 // pred_region
          %192 = dma.done %s185, 4096
        $region40: #{tpu_custom_call.1} parent=31 // pred_fallthru
          _
        %p193 = pneg %p37
        %p194 = pneg %p34
        %s195 = sand.u32 %s50, 1
        %s196 = scalar_lea.sflag [#allocation6], %s195
        %s197 = sand.u32 %s50, 1
        %s198 = smul.addr %s197, 256
        %s199 = scalar_lea.vmem [#allocation5], %s198
        %p200 = pneg %p63
        %p201 = pneg %p60
        %p202 = scmp.lt.s32.totalorder %s21, 1
        %s203 = scalar_select %p202, %s21, 1
        %s204 = scalar_lea.vmem %s2, %s203
        %p205 = pneg %p89
        %p206 = pneg %p86
        %p207 = pneg %p115
        %p208 = pneg %p112
        %s209 = sand.u32 %s102, 1
        %s210 = scalar_lea.sflag [#allocation4], %s209
        %s211 = sand.u32 %s102, 1
        %s212 = smul.addr %s211, 2
        %s213 = scalar_lea.vmem [#allocation7], %s212
        %s214 = smul.u32 16, %s21
        %p215 = scmp.lt.s32.totalorder %s21, 1
        %s216 = scalar_select %p215, %s21, 1
        %s217 = scalar_lea.vmem %s2, %s216
        %v218 = vld [vmem:[#allocation2] sm:$0xf]
        %v219 = vld [vmem:[%s188] sm:$0xff]
        %v220 = vld [vmem:[%s188 + $0x8] sm:$0xff]
        %v221 = vld [vmem:[%s188 + $0x10] sm:$0xff]
        %v222 = vld [vmem:[%s188 + $0x18] sm:$0xff]
        %v223 = vld [vmem:[%s188 + $0x20] sm:$0xff]
        %v224 = vld [vmem:[%s188 + $0x28] sm:$0xff]
        %v225 = vld [vmem:[%s188 + $0x30] sm:$0xff]
        %v226 = vld [vmem:[%s188 + $0x38] sm:$0xff]
        %v227 = vld [vmem:[%s188 + $0x40] sm:$0xff]
        %v228 = vld [vmem:[%s188 + $0x48] sm:$0xff]
        %v229 = vld [vmem:[%s188 + $0x50] sm:$0xff]
        %v230 = vld [vmem:[%s188 + $0x58] sm:$0xff]
        %v231 = vld [vmem:[%s188 + $0x60] sm:$0xff]
        %v232 = vld [vmem:[%s188 + $0x68] sm:$0xff]
        %v233 = vld [vmem:[%s188 + $0x70] sm:$0xff]
        %v234 = vld [vmem:[%s188 + $0x78] sm:$0xff]
        %v235 = vld [vmem:[%s188 + $0x80] sm:$0xff]
        %v236 = vld [vmem:[%s188 + $0x88] sm:$0xff]
        %v237 = vld [vmem:[%s188 + $0x90] sm:$0xff]
        %v238 = vld [vmem:[%s188 + $0x98] sm:$0xff]
        %v239 = vld [vmem:[%s188 + $0xa0] sm:$0xff]
        %v240 = vld [vmem:[%s188 + $0xa8] sm:$0xff]
        %v241 = vld [vmem:[%s188 + $0xb0] sm:$0xff]
        %v242 = vld [vmem:[%s188 + $0xb8] sm:$0xff]
        %v243 = vld [vmem:[%s188 + $0xc0] sm:$0xff]
        %v244 = vld [vmem:[%s188 + $0xc8] sm:$0xff]
        %v245 = vld [vmem:[%s188 + $0xd0] sm:$0xff]
        %v246 = vld [vmem:[%s188 + $0xd8] sm:$0xff]
        %v247 = vld [vmem:[%s188 + $0xe0] sm:$0xff]
        %v248 = vld [vmem:[%s188 + $0xe8] sm:$0xff]
        %v249 = vld [vmem:[%s188 + $0xf0] sm:$0xff]
        %v250 = vld [vmem:[%s188 + $0xf8] sm:$0xff]
        %v251 = vld [vmem:[%s217] sm:$0x1]
        %v253 = vlaneseq
        %v254 = vshrl.u32 %v253, 7
        %v255 = vsub.s32 0, %v254
        %v256 = vrot.slane %v251, %v255
        %v260 = vunpack.c.l.s4 1983009808
        %v261 = vunpack.c.0.s8 %v260
        %v262 = vlaneseq
        %v263 = vshrl.u32 %v262, 7
        %v264 = vsub.s32 %v261, %v263
        %v265 = vrot.slane %v218, %v264
        %v266 = vcombine.high %v265, %v265
        %269 = vmatprep.subr.mxu0 %v250
        %270 = vmatpush1.xpose.msra.mxu0 %v249
        %271 = vmatprep.subr.mxu0 %v248
        %272 = vmatpush1.xpose.msra.mxu0 %v247
        %273 = vmatprep.subr.mxu0 %v246
        %274 = vmatpush1.xpose.msra.mxu0 %v245
        %275 = vmatprep.subr.mxu0 %v244
        %276 = vmatpush1.xpose.msra.mxu0 %v243
        %277 = vmatprep.subr.mxu0 %v242
        %278 = vmatpush1.xpose.msra.mxu0 %v241
        %279 = vmatprep.subr.mxu0 %v240
        %280 = vmatpush1.xpose.msra.mxu0 %v239
        %281 = vmatprep.subr.mxu0 %v238
        %282 = vmatpush1.xpose.msra.mxu0 %v237
        %283 = vmatprep.subr.mxu0 %v236
        %284 = vmatpush1.xpose.msra.mxu0 %v235
        %285 = vmatprep.subr.mxu0 %v234
        %286 = vmatpush1.xpose.msra.mxu0 %v233
        %287 = vmatprep.subr.mxu0 %v232
        %288 = vmatpush1.xpose.msra.mxu0 %v231
        %289 = vmatprep.subr.mxu0 %v230
        %290 = vmatpush1.xpose.msra.mxu0 %v229
        %291 = vmatprep.subr.mxu0 %v228
        %292 = vmatpush1.xpose.msra.mxu0 %v227
        %293 = vmatprep.subr.mxu0 %v226
        %294 = vmatpush1.xpose.msra.mxu0 %v225
        %295 = vmatprep.subr.mxu0 %v224
        %296 = vmatpush1.xpose.msra.mxu0 %v223
        %297 = vmatprep.subr.mxu0 %v222
        %298 = vmatpush1.xpose.msra.mxu0 %v221
        %299 = vmatprep.subr.mxu0 %v220
        %300 = vmatpush1.xpose.msra.mxu0 %v219
        %301 = vmatprep.subr.mxu0 0.0
        %302 = vmatpush2.xpose.msra.mxu0 0.0
        %303 = vmatprep.subr.mxu0 0.0
        %304 = vmatpush2.xpose.msra.mxu0 0.0
        %305 = vmatprep.subr.mxu0 0.0
        %306 = vmatpush2.xpose.msra.mxu0 0.0
        %307 = vmatprep.subr.mxu0 0.0
        %308 = vmatpush2.xpose.msra.mxu0 0.0
        %309 = vmatprep.subr.mxu0 0.0
        %310 = vmatpush2.xpose.msra.mxu0 0.0
        %311 = vmatprep.subr.mxu0 0.0
        %312 = vmatpush2.xpose.msra.mxu0 0.0
        %313 = vmatprep.subr.mxu0 0.0
        %314 = vmatpush2.xpose.msra.mxu0 0.0
        %315 = vmatprep.subr.mxu0 0.0
        %316 = vmatpush2.xpose.msra.mxu0 0.0
        %317 = vmatprep.subr.mxu0 0.0
        %318 = vmatpush2.xpose.msra.mxu0 0.0
        %319 = vmatprep.subr.mxu0 0.0
        %320 = vmatpush2.xpose.msra.mxu0 0.0
        %321 = vmatprep.subr.mxu0 0.0
        %322 = vmatpush2.xpose.msra.mxu0 0.0
        %323 = vmatprep.subr.mxu0 0.0
        %324 = vmatpush2.xpose.msra.mxu0 0.0
        %325 = vmatprep.subr.mxu0 0.0
        %326 = vmatpush2.xpose.msra.mxu0 0.0
        %327 = vmatprep.subr.mxu0 0.0
        %328 = vmatpush2.xpose.msra.mxu0 0.0
        %329 = vmatprep.subr.mxu0 0.0
        %330 = vmatpush2.xpose.msra.mxu0 0.0
        %331 = vmatprep.subr.mxu0 0.0
        %332 = vmatpush2.xpose.msra.mxu0 0.0
        %333 = vmatprep.mubr.f32.mxu0 %v266
        %334 = vmatmul.mubr.f32.gmra.mxu0 %v265
        %v335 = vpop.f32.mrf.mxu0
        %v336 = vadd.f32 %v256, %v335
        %v337 = vpop.f32.mrf.mxu0
        %338 = vdwg.mxu0
        %v339 = vtanh.pop %v336
        %340 = vst [vmem:[%s213] sm:$0x3] %v339
        %s341 = sand.u32 %s102, 1
        %s342 = scalar_lea.sflag [#allocation4], %s341
        %s343 = sand.u32 %s102, 1
        %s344 = smul.addr %s343, 2
        %s345 = scalar_lea.vmem [#allocation7], %s344
        // Predicated region
        $region41: #{tpu_custom_call.1} parent=31 // pred_check
          %p346 = pneg %p112
        $region42: #{tpu_custom_call.1} parent=31 // pred_check_branch
          %348 = sbr.rel (%p346) target = $region44
        $region43: #{tpu_custom_call.1} parent=31 // pred_region
          %s350 = ssub.s32 32, 32
          %351 = vsyncadd %s342, %s350
          %s352 = smul.addr %s21, 32
          %s353 = scalar_lea.hbm %s3, %s352
          %s355 = sshll.u32 %s345, 4
          %s356 = int_to_ptr.vmem [resolvable:$true] %s355
          %358 = dma.vmem_to_hbm [thread:$0]  %s356, 32, %s353, %s342
        $region44: #{tpu_custom_call.1} parent=31 // pred_fallthru
          _
      $region32: #{tpu_custom_call.1} parent=5 // pred_fallthru
        _
      %p359 = scmp.le.s32.totalorder 2, %s16
      // Predicated region
      $region45: #{tpu_custom_call.1} parent=5 // pred_check
        %p360 = pneg %p359
      $region46: #{tpu_custom_call.1} parent=5 // pred_check_branch
        %362 = sbr.rel (%p360) target = $region48
      $region47: #{tpu_custom_call.1} parent=5 // pred_region
        %s363 = ssub.s32 %s16, 2
        // Predicated region
        $region49: #{tpu_custom_call.1} parent=47 // pred_check
          %p364 = pneg %p118
        $region50: #{tpu_custom_call.1} parent=47 // pred_check_branch
          %366 = sbr.rel (%p364) target = $region52
        $region51: #{tpu_custom_call.1} parent=47 // pred_region
          %s367 = sand.u32 %s103, 1
          %s368 = scalar_lea.sflag [#allocation4], %s367
          %s369 = sand.u32 %s103, 1
          %s370 = smul.addr %s369, 2
          %s371 = scalar_lea.vmem [#allocation7], %s370
          %372 = dma.done %s368, 32
        $region52: #{tpu_custom_call.1} parent=47 // pred_fallthru
          _
      $region48: #{tpu_custom_call.1} parent=5 // pred_fallthru
        _
    $region6: #{tpu_custom_call.1} parent=1 // loop_footer
      %s20 = sadd.s32 1, %s16
    $region7: #{tpu_custom_call.1} parent=1 // loop_footer_branch
      %15 = sbr.rel target = $region3
    $region8: #{tpu_custom_call.1} parent=1 // loop_exit
      _
    %373 = vsyncpa [#allocation3], 1
    %s374 = scalar_lea.sflag [#allocation3], 1
    %375 = vsyncpa %s374, 1
    %376 = vsyncpa [#allocation6], 1
    %s377 = scalar_lea.sflag [#allocation6], 1
    %378 = vsyncpa %s377, 1
    %379 = vsyncpa [#allocation4], 1
    %s380 = scalar_lea.sflag [#allocation4], 1
    %381 = vsyncpa %s380, 1

</llo_original>
